<compile_context>
chip_gen: v6e
topology: v6e:2x2x1
jax: 0.10.0
libtpu: 0.0.40
codegen_flags: <defaults>
</compile_context>

<pallas_src>
from functools import partial

import jax
import jax.numpy as jnp
from jax.experimental import pallas as pl
from jax.experimental.pallas import tpu as pltpu

_LANES = 128


def _dice_kernel(*refs, has_mask, with_logits, square_denominator,
                 last_block_valid_rows, block_rows):
    """Grid axis 0 ("parallel") walks (block_rows, 128) tiles of the flattened
    operands; each step writes (1, 2, 128) per-lane partial sums [inter, denom]."""
    if has_mask:
        x_ref, t_ref, m_ref, o_ref = refs
    else:
        x_ref, t_ref, o_ref = refs
        m_ref = None

    def accumulate(valid_rows):
        x = x_ref[...].astype(jnp.float32)          # (block_rows, 128)
        t = t_ref[...].astype(jnp.float32)

        if with_logits:
            # sigmoid(x) = 0.5 * (tanh(x/2) + 1): single EUP transcendental.
            x = 0.5 * (jnp.tanh(0.5 * x) + 1.0)

        if has_mask:
            m = m_ref[...].astype(jnp.float32)
            x = x * m
            t = t * m

        if valid_rows is not None:
            # Only the ragged LAST block pays for this mask.
            row = jax.lax.broadcasted_iota(jnp.int32, x.shape, 0)
            keep = row < valid_rows
            x = jnp.where(keep, x, 0.0)
            t = jnp.where(keep, t, 0.0)

        inter = x * t
        denom = (x * x + t * t) if square_denominator else (x + t)

        part_i = jnp.sum(inter, axis=0, keepdims=True)   # (1, 128) per-lane partials
        part_d = jnp.sum(denom, axis=0, keepdims=True)
        o_ref[...] = jnp.concatenate([part_i, part_d], axis=0)[None]   # (1, 2, 128)

    if last_block_valid_rows == block_rows:
        accumulate(None)                                  # no raggedness anywhere
    else:
        step = pl.program_id(0)
        last = pl.num_programs(0) - 1

        @pl.when(step < last)
        def _():
            accumulate(None)

        @pl.when(step == last)
        def _():
            accumulate(last_block_valid_rows)


def dice_loss(inp, target, mask=None, *, smooth=1e-8, square_denominator=False,
              with_logits=True, max_block_rows=2048):
    """Pallas DiceLoss forward. Returns a scalar float32."""
    n = int(inp.size)
    assert int(target.size) == n, "input/target must have the same element count"
    if mask is not None:
        assert int(mask.size) == n, "mask must have the same element count"
        if mask.dtype == jnp.bool_:
            mask = mask.astype(jnp.int8)     # keep it 1 byte in HBM, cast in kernel

    # Non-floating logits would break the "safe pad value" trick (rare path).
    if with_logits and not jnp.issubdtype(inp.dtype, jnp.floating):
        inp = inp.astype(jnp.float32)

    rows = -(-n // _LANES)                   # ceil(n / 128)
    pad_lanes = rows * _LANES - n            # 0 in the common aligned case

    # Balanced block_rows: padding waste < one block; 32-sublane multiples cover
    # f32 (8), bf16/f16 (16) and int8/bool (32) tiling.
    num_blocks = -(-rows // max_block_rows)
    if num_blocks == 1:
        block_rows = rows                    # single full-extent block
    else:
        per_block = -(-rows // num_blocks)
        block_rows = -(-per_block // 32) * 32
        num_blocks = -(-rows // block_rows)
        if num_blocks == 1:
            block_rows = rows
    last_block_valid_rows = rows - (num_blocks - 1) * block_rows

    # Lane-pad fill values chosen so padded elements contribute exactly zero:
    # sigmoid(finfo.min) == 0 when with_logits, else 0; target/mask padded with 0.
    inp_fill = jnp.finfo(inp.dtype).min if with_logits else 0

    def prep(a, fill):
        flat = a.reshape(-1)
        if pad_lanes:
            flat = jnp.concatenate(
                [flat, jnp.full((pad_lanes,), fill, dtype=a.dtype)])
        return flat.reshape(rows, _LANES)    # free reshape when pad_lanes == 0

    operands = [prep(inp, inp_fill), prep(target, 0)]
    has_mask = mask is not None
    if has_mask:
        operands.append(prep(mask, 0))

    tile = pl.BlockSpec((block_rows, _LANES), lambda i: (i, 0))
    kernel = partial(
        _dice_kernel,
        has_mask=has_mask,
        with_logits=with_logits,
        square_denominator=square_denominator,
        last_block_valid_rows=last_block_valid_rows,
        block_rows=block_rows,
    )

    parts = pl.pallas_call(
        kernel,
        out_shape=jax.ShapeDtypeStruct((num_blocks, 2, _LANES), jnp.float32),
        grid_spec=pltpu.PrefetchScalarGridSpec(
            num_scalar_prefetch=0,
            grid=(num_blocks,),
            in_specs=[tile] * len(operands),
            out_specs=pl.BlockSpec((1, 2, _LANES), lambda i: (i, 0, 0)),
        ),
        compiler_params=pltpu.CompilerParams(
            dimension_semantics=("parallel",),          # independent per-block partials
            vmem_limit_bytes=32 * 1024 * 1024,
        ),
    )(*operands)

    # Tiny final reduce + divide in plain JAX (a few KiB of partials).
    inter = jnp.sum(parts[:, 0, :])
    denom = jnp.sum(parts[:, 1, :])
    return 1.0 - (2.0 * inter + float(smooth)) / (denom + float(smooth))


def _reference(inp, target, mask=None, *, smooth=1e-8, square_denominator=False,
               with_logits=True):
    """Pure-JAX reference matching the PyTorch forward."""
    fi = inp.reshape(-1).astype(jnp.float32)
    ft = target.reshape(-1).astype(jnp.float32)
    if with_logits:
        fi = jax.nn.sigmoid(fi)
    if mask is not None:
        fm = mask.reshape(-1).astype(jnp.float32)
        fi = fi * fm
        ft = ft * fm
    inter = jnp.sum(fi * ft)
    if not square_denominator:
        return 1.0 - (2.0 * inter + smooth) / (jnp.sum(fi) + jnp.sum(ft) + smooth)
    return 1.0 - (2.0 * inter + smooth) / (jnp.sum(fi * fi) + jnp.sum(ft * ft) + smooth)


if __name__ == "__main__":
    root = jax.random.PRNGKey(0)
    kx, kt, km, kx2, kt2, km2, kx3, kt3 = jax.random.split(root, 8)

    # (1) Default config: f32 logits + binary targets, shape (2, 4, 16, 16), no mask.
    x = jax.random.normal(kx, (2, 4, 16, 16), jnp.float32)
    t = (jax.random.uniform(kt, (2, 4, 16, 16)) > 0.5).astype(jnp.float32)
    m = (jax.random.uniform(km, (2, 4, 16, 16)) > 0.25).astype(jnp.float32)

    out = jax.block_until_ready(dice_loss(x, t))
    ref = _reference(x, t)
    assert jnp.allclose(out, ref, atol=1e-5, rtol=1e-5), "mismatch (default config)"

    # (2) Mask + square-denominator config.
    out_m = jax.block_until_ready(dice_loss(x, t, m, square_denominator=True))
    ref_m = _reference(x, t, m, square_denominator=True)
    assert jnp.allclose(out_m, ref_m, atol=1e-5, rtol=1e-5), "mismatch (mask + sq denom)"

    # (3) Native-bf16 streaming + multi-block grid with a ragged last block
    #     (small max_block_rows forces several grid steps), masked.
    shape3 = (2, 520, 128)   # rows = 1040 -> 5 blocks of 224 rows, last block ragged
    x3 = jax.random.normal(kx2, shape3).astype(jnp.bfloat16)
    t3 = (jax.random.uniform(kt2, shape3) > 0.5).astype(jnp.bfloat16)
    m3 = (jax.random.uniform(km2, shape3) > 0.25).astype(jnp.bfloat16)
    out3 = jax.block_until_ready(dice_loss(x3, t3, m3, max_block_rows=256))
    ref3 = _reference(x3, t3, m3)
    assert jnp.allclose(out3, ref3, atol=1e-3, rtol=1e-3), "mismatch (bf16 multi-block)"

    # (4) Element count not a multiple of 128 (lane-pad path), with and without logits.
    x4 = jax.random.normal(kx3, (3, 5, 7), jnp.float32)
    t4 = (jax.random.uniform(kt3, (3, 5, 7)) > 0.5).astype(jnp.float32)
    out4 = jax.block_until_ready(dice_loss(x4, t4))
    ref4 = _reference(x4, t4)
    assert jnp.allclose(out4, ref4, atol=1e-5, rtol=1e-5), "mismatch (ragged n, logits)"

    p4 = jax.nn.sigmoid(x4)
    out5 = jax.block_until_ready(dice_loss(p4, t4, with_logits=False))
    ref5 = _reference(p4, t4, with_logits=False)
    assert jnp.allclose(out5, ref5, atol=1e-5, rtol=1e-5), "mismatch (ragged n, probs)"

    print("KERNEL_OK")
</pallas_src>

<mosaic_0001>
module attributes {stable_mosaic.version = 11 : i64} {
  func.func @_dice_kernel(%arg0: i32, %arg1: memref<16x128xf32, #tpu.memory_space<vmem>>, %arg2: memref<16x128xf32, #tpu.memory_space<vmem>>, %arg3: memref<1x2x128xf32, #tpu.memory_space<vmem>>) attributes {dimension_semantics = [#tpu.dimension_semantics<parallel>], iteration_bounds = array<i64: 1>, scalar_prefetch = 0 : i64, scratch_operands = 0 : i64, tpu.core_type = #tpu.core_type<tc>, window_params = [{transform_indices = @transform_0, window_bounds = array<i64: 16, 128>}, {transform_indices = @transform_1, window_bounds = array<i64: 16, 128>}, {transform_indices = @transform_2, window_bounds = array<i64: 1, 2, 128>}]} {
    %c0 = arith.constant 0 : index
    %c0_0 = arith.constant 0 : index
    %0 = vector.load %arg1[%c0, %c0_0] : memref<16x128xf32, #tpu.memory_space<vmem>>, vector<16x128xf32>
    %c0_1 = arith.constant 0 : index
    %c0_2 = arith.constant 0 : index
    %1 = vector.load %arg2[%c0_1, %c0_2] : memref<16x128xf32, #tpu.memory_space<vmem>>, vector<16x128xf32>
    %cst = arith.constant 5.000000e-01 : f32
    %2 = vector.broadcast %cst : f32 to vector<16x128xf32>
    %3 = arith.mulf %2, %0 : vector<16x128xf32>
    %4 = math.tanh %3 : vector<16x128xf32>
    %cst_3 = arith.constant 1.000000e+00 : f32
    %5 = vector.broadcast %cst_3 : f32 to vector<16x128xf32>
    %6 = arith.addf %4, %5 : vector<16x128xf32>
    %cst_4 = arith.constant 5.000000e-01 : f32
    %7 = vector.broadcast %cst_4 : f32 to vector<16x128xf32>
    %8 = arith.mulf %7, %6 : vector<16x128xf32>
    %9 = arith.mulf %8, %1 : vector<16x128xf32>
    %10 = arith.addf %8, %1 : vector<16x128xf32>
    %cst_5 = arith.constant dense<0.000000e+00> : vector<128xf32>
    %11 = vector.multi_reduction <add>, %9, %cst_5 [0] : vector<16x128xf32> to vector<128xf32>
    %12 = vector.shape_cast %11 : vector<128xf32> to vector<1x128xf32>
    %cst_6 = arith.constant dense<0.000000e+00> : vector<128xf32>
    %13 = vector.multi_reduction <add>, %10, %cst_6 [0] : vector<16x128xf32> to vector<128xf32>
    %14 = vector.shape_cast %13 : vector<128xf32> to vector<1x128xf32>
    %15 = tpu.concatenate %12, %14 in 0 : vector<1x128xf32>, vector<1x128xf32> -> vector<2x128xf32>
    %16 = vector.shape_cast %15 : vector<2x128xf32> to vector<1x2x128xf32>
    %c0_7 = arith.constant 0 : index
    %c0_8 = arith.constant 0 : index
    %c0_9 = arith.constant 0 : index
    %17 = vector.load %arg3[%c0_7, %c0_8, %c0_9] : memref<1x2x128xf32, #tpu.memory_space<vmem>>, vector<1x2x128xf32>
    tpu.vector_store %arg3[%c0_7, %c0_8, %c0_9], %16 {strides = array<i32>} : memref<1x2x128xf32, #tpu.memory_space<vmem>>, vector<1x2x128xf32>,
    return
  }
  func.func @transform_0(%arg0: i32) -> (i32, i32) {
    %c0_i32 = arith.constant 0 : i32
    %c0_i32_0 = arith.constant 0 : i32
    return %arg0, %c0_i32 : i32, i32
  }
  func.func @transform_1(%arg0: i32) -> (i32, i32) {
    %c0_i32 = arith.constant 0 : i32
    %c0_i32_0 = arith.constant 0 : i32
    return %arg0, %c0_i32 : i32, i32
  }
  func.func @transform_2(%arg0: i32) -> (i32, i32, i32) {
    %c0_i32 = arith.constant 0 : i32
    %c0_i32_0 = arith.constant 0 : i32
    %c0_i32_1 = arith.constant 0 : i32
    return %arg0, %c0_i32, %c0_i32_0 : i32, i32, i32
  }
}

</mosaic_0001>

<llo_original>
// kernel: tpu_custom_call.1
$region0: #{tpu_custom_call.1}
  #allocation0 [shape = 'u32[]', space=smem, size = 0x4, offset = 0x4, fixed_abs, tag = 'smem constant byte address 0x4 - core index']
  #allocation1 [shape = 'u32[144,128]{1,0:T(1,128)}', space=vmem, size = 0x12000, scoped, tag = 'internal scratch']
  %s0 = inlined_call_operand.hbm [shape: f32[16,128], index: 0, kind: input, shape index: {}]
  %s1 = inlined_call_operand.hbm [shape: f32[16,128], index: 1, kind: input, shape index: {}]
  %s2 = inlined_call_operand.hbm [shape: f32[1,2,128], index: 2, kind: output, shape index: {}]
  %s3 = sld [smem:[#allocation0]]
  $region26: #{tpu_custom_call.1} parent=0
    _
  %s5 = ssub.s32 1, %s3
  %s6 = scalar_select 0, %s5, %s3
  $region1: #{tpu_custom_call.1} parent=0
    #allocation2 [shape = 'u8[8192]{0}', space=vmem, size = 0x2000, scoped, tag = 'input window, operand 0, single buffered']
    #allocation3 [shape = 's32[1]{0}', space=sflag, size = 0x4, scoped, tag = 'scoped memory for tpu_custom_call.1']
    #allocation4 [shape = 's32[1]{0}', space=sflag, size = 0x4, scoped, tag = 'scoped memory for tpu_custom_call.1']
    #allocation5 [shape = 'u8[8192]{0}', space=vmem, size = 0x2000, scoped, tag = 'input window, operand 1, single buffered']
    #allocation6 [shape = 's32[1]{0}', space=sflag, size = 0x4, scoped, tag = 'scoped memory for tpu_custom_call.1']
    #allocation7 [shape = 'u8[1024]{0}', space=vmem, size = 0x400, scoped, tag = 'output window, operand 0, single buffered']
    %7 = vsyncpa [#allocation3], 0
    %8 = vsyncpa [#allocation6], 0
    %9 = vsyncpa [#allocation4], 0
    // Predicated region
    $region2: #{tpu_custom_call.1} parent=1 // pred_check
      _
    $region3: #{tpu_custom_call.1} parent=1 // pred_check_branch
      %11 = sbr.rel (0) target = $region5
    $region4: #{tpu_custom_call.1} parent=1 // pred_region
      %s13 = ssub.s32 256, 256
      %14 = vsyncadd [#allocation3], %s13
      %s15 = sshll.u32 [#allocation2], 4
      %s16 = int_to_ptr.vmem [resolvable:$true] %s15
      %21 = dma.hbm_to_vmem [thread:$0]  %s0, 256, %s16, [#allocation3], 128, 128, 8
    $region5: #{tpu_custom_call.1} parent=1 // pred_fallthru
      _
    // Predicated region
    $region6: #{tpu_custom_call.1} parent=1 // pred_check
      _
    $region7: #{tpu_custom_call.1} parent=1 // pred_check_branch
      %23 = sbr.rel (0) target = $region9
    $region8: #{tpu_custom_call.1} parent=1 // pred_region
      %s25 = ssub.s32 256, 256
      %26 = vsyncadd [#allocation6], %s25
      %s27 = sshll.u32 [#allocation5], 4
      %s28 = int_to_ptr.vmem [resolvable:$true] %s27
      %33 = dma.hbm_to_vmem [thread:$0]  %s1, 256, %s28, [#allocation6], 128, 128, 8
    $region9: #{tpu_custom_call.1} parent=1 // pred_fallthru
      _
    // Predicated region
    $region10: #{tpu_custom_call.1} parent=1 // pred_check
      _
    $region11: #{tpu_custom_call.1} parent=1 // pred_check_branch
      %35 = sbr.rel (0) target = $region13
    $region12: #{tpu_custom_call.1} parent=1 // pred_region
      %36 = dma.done [#allocation3], 256
    $region13: #{tpu_custom_call.1} parent=1 // pred_fallthru
      _
    // Predicated region
    $region14: #{tpu_custom_call.1} parent=1 // pred_check
      _
    $region15: #{tpu_custom_call.1} parent=1 // pred_check_branch
      %38 = sbr.rel (0) target = $region17
    $region16: #{tpu_custom_call.1} parent=1 // pred_region
      %39 = dma.done [#allocation6], 256
    $region17: #{tpu_custom_call.1} parent=1 // pred_fallthru
      _
    %v40 = vld [vmem:[#allocation2] sm:$0xff]
    %v41 = vld [vmem:[#allocation2 + $0x8] sm:$0xff]
    %v42 = vld [vmem:[#allocation5] sm:$0xff]
    %v43 = vld [vmem:[#allocation5 + $0x8] sm:$0xff]
    %v44 = vmul.f32 %v40, 0.5
    %v45 = vmul.f32 %v41, 0.5
    %v46 = vtanh.pop %v44
    %v47 = vtanh.pop %v45
    %v48 = vadd.f32 %v46, 1.0
    %v49 = vadd.f32 %v47, 1.0
    %v50 = vmul.f32 %v48, 0.5
    %v51 = vmul.f32 %v49, 0.5
    %v52 = vmul.f32 %v50, %v42
    %v53 = vmul.f32 %v51, %v43
    %v54 = vadd.f32 %v50, %v42
    %v55 = vadd.f32 %v51, %v43
    %v56 = vadd.f32 %v52, %v53
    %v57 = vrot.slane %v56, 4
    %v58 = vadd.f32 %v56, %v57
    %v59 = vrot.slane %v58, 2
    %v60 = vadd.f32 %v58, %v59
    %v61 = vrot.slane %v60, 1
    %v62 = vadd.f32 %v60, %v61
    %v63 = vadd.f32 %v54, %v55
    %v64 = vrot.slane %v63, 4
    %v65 = vadd.f32 %v63, %v64
    %v66 = vrot.slane %v65, 2
    %v67 = vadd.f32 %v65, %v66
    %v68 = vrot.slane %v67, 1
    %v69 = vadd.f32 %v67, %v68
    %vm70 = vcmask 1040384
    %v71 = vsel %vm70, %v62, %v69
    %72 = vst [vmem:[#allocation7] sm:$0x3] %v71
    // Predicated region
    $region18: #{tpu_custom_call.1} parent=1 // pred_check
      _
    $region19: #{tpu_custom_call.1} parent=1 // pred_check_branch
      %74 = sbr.rel (0) target = $region21
    $region20: #{tpu_custom_call.1} parent=1 // pred_region
      %s76 = ssub.s32 32, 32
      %77 = vsyncadd [#allocation4], %s76
      %s79 = sshll.u32 [#allocation7], 4
      %s80 = int_to_ptr.vmem [resolvable:$true] %s79
      %82 = dma.vmem_to_hbm [thread:$0]  %s80, 32, %s2, [#allocation4]
    $region21: #{tpu_custom_call.1} parent=1 // pred_fallthru
      _
    // Predicated region
    $region22: #{tpu_custom_call.1} parent=1 // pred_check
      _
    $region23: #{tpu_custom_call.1} parent=1 // pred_check_branch
      %84 = sbr.rel (0) target = $region25
    $region24: #{tpu_custom_call.1} parent=1 // pred_region
      %85 = dma.done [#allocation4], 32
    $region25: #{tpu_custom_call.1} parent=1 // pred_fallthru
      _
    %86 = vsyncpa [#allocation3], 1
    %87 = vsyncpa [#allocation6], 1
    %88 = vsyncpa [#allocation4], 1

</llo_original>
